<compile_context>
chip_gen: v5e
topology: v5e:2x2
jax: 0.10.0
libtpu: 0.0.40
codegen_flags: <defaults>
</compile_context>

<pallas_src>
import functools

import numpy as np
import jax
import jax.numpy as jnp
from jax.experimental import pallas as pl
from jax.experimental.pallas import tpu as pltpu


# ----------------------------------------------------------------------------
# helpers
# ----------------------------------------------------------------------------

def _pick_row_block(m, target):
    """Largest multiple-of-8 divisor of m that is <= target (else m: single block)."""
    if m <= target:
        return m
    start = target - (target % 8)
    for b in range(start, 7, -8):
        if m % b == 0:
            return b
    return m


def _dense_init(key, fan_in, fan_out):
    kw, kb = jax.random.split(key)
    bound = 1.0 / float(np.sqrt(fan_in))
    w = jax.random.uniform(kw, (fan_in, fan_out), jnp.float32, -bound, bound)
    b = jax.random.uniform(kb, (1, fan_out), jnp.float32, -bound, bound)
    return w, b


# ----------------------------------------------------------------------------
# Kernel A: proj_pos(1x1 conv) + ReLU + Q projection  (softmax scale pre-folded into wq/bq)
# ----------------------------------------------------------------------------

def _q_chain_kernel(qin_ref, wp_ref, bp_ref, wq_ref, bq_ref, out_ref, *, mxu):
    q = qin_ref[0, 0]                                                  # (Lq, Ct)
    h = jnp.dot(q.astype(mxu), wp_ref[0], preferred_element_type=jnp.float32) + bp_ref[0]
    h = jnp.maximum(h, 0.0)
    out_ref[0, 0] = jnp.dot(h.astype(mxu), wq_ref[0],
                            preferred_element_type=jnp.float32) + bq_ref[0]


def q_chain(qin, wp, bp, wq, bq, mxu):
    P, Nq, Lq, Ct = qin.shape
    return pl.pallas_call(
        functools.partial(_q_chain_kernel, mxu=mxu),
        out_shape=jax.ShapeDtypeStruct((P, Nq, Lq, Ct), jnp.float32),
        grid=(P, Nq),
        in_specs=[
            pl.BlockSpec((1, 1, Lq, Ct), lambda p, n: (p, n, 0, 0)),
            pl.BlockSpec((1, Ct, Ct), lambda p, n: (p, 0, 0)),
            pl.BlockSpec((1, 1, Ct), lambda p, n: (p, 0, 0)),
            pl.BlockSpec((1, Ct, Ct), lambda p, n: (p, 0, 0)),
            pl.BlockSpec((1, 1, Ct), lambda p, n: (p, 0, 0)),
        ],
        out_specs=pl.BlockSpec((1, 1, Lq, Ct), lambda p, n: (p, n, 0, 0)),
        compiler_params=pltpu.CompilerParams(dimension_semantics=("parallel", "parallel")),
    )(qin, wp, bp, wq, bq)


# ----------------------------------------------------------------------------
# Kernel B: dual-projector 3x3 conv via single im2col matmul (+bias, per-batch BN partial stats)
# ----------------------------------------------------------------------------

def _conv_dual_kernel(xp_ref, w_ref, b_ref, y_ref, st_ref, xcol_ref, ybuf_ref, *, H, W, cs, mxu):
    xp = xp_ref[0]                                                     # (H+2, W+2, Cs)
    # build the (H*W, 9*Cs) im2col slab in VMEM scratch (static minor-slice stores)
    for k in range(9):
        kh, kw = divmod(k, 3)
        xcol_ref[:, k * cs:(k + 1) * cs] = xp[kh:kh + H, kw:kw + W, :].reshape(H * W, cs)
    # single K=9*Cs matmul produces both projectors' conv outputs (channels [p0 | p1])
    ybuf_ref[...] = jnp.dot(xcol_ref[...].astype(mxu), w_ref[...],
                            preferred_element_type=jnp.float32) + b_ref[...]
    y_ref[0, 0] = ybuf_ref[:, :cs]
    y_ref[1, 0] = ybuf_ref[:, cs:]
    yv = ybuf_ref[...]
    s1 = jnp.sum(yv, axis=0, keepdims=True)
    s2 = jnp.sum(yv * yv, axis=0, keepdims=True)
    st_ref[0] = jnp.concatenate([s1, s2], axis=0)                      # (2, 2*Cs)


def conv3x3_dual(xpad, w_cat, b_cat, H, W, Cs, mxu):
    N = xpad.shape[0]
    C2 = w_cat.shape[1]                                                # 2*Cs
    return pl.pallas_call(
        functools.partial(_conv_dual_kernel, H=H, W=W, cs=Cs, mxu=mxu),
        out_shape=(jax.ShapeDtypeStruct((2, N, H * W, Cs), jnp.float32),
                   jax.ShapeDtypeStruct((N, 2, C2), jnp.float32)),
        grid=(N,),
        in_specs=[
            pl.BlockSpec((1, H + 2, W + 2, Cs), lambda n: (n, 0, 0, 0)),
            pl.BlockSpec((9 * Cs, C2), lambda n: (0, 0)),
            pl.BlockSpec((1, C2), lambda n: (0, 0)),
        ],
        out_specs=(pl.BlockSpec((2, 1, H * W, Cs), lambda n: (0, n, 0, 0)),
                   pl.BlockSpec((1, 2, C2), lambda n: (n, 0, 0))),
        scratch_shapes=[pltpu.VMEM((H * W, 9 * Cs), jnp.float32),
                        pltpu.VMEM((H * W, C2), jnp.float32)],
        compiler_params=pltpu.CompilerParams(dimension_semantics=("parallel",)),
    )(xpad, w_cat, b_cat)


# ----------------------------------------------------------------------------
# Kernel C: BN-apply + ReLU + pos-embed + fused K|V proj + MHA + out-proj (kv never leaves VMEM)
# ----------------------------------------------------------------------------

def _attn_chain_kernel(y_ref, sc_ref, sh_ref, pos_ref, wkv_ref, bkv_ref,
                       q_ref, wo_ref, bo_ref, o_ref, o_buf, *, nh, dh, ct, mxu):
    # BN(train stats) apply + ReLU + positional embedding
    s_tok = jnp.maximum(y_ref[0, 0] * sc_ref[0] + sh_ref[0], 0.0) + pos_ref[0]   # (Ls, Cs)
    # fused K|V projection (one K=Cs matmul producing [K | V])
    kv = jnp.dot(s_tok.astype(mxu), wkv_ref[0],
                 preferred_element_type=jnp.float32) + bkv_ref[0]                # (Ls, 2*Ct)
    q = q_ref[0, 0]                                                              # (Lq, Ct), pre-scaled
    # per-head attention; per-head outputs collected in VMEM scratch, one K=Ct out-proj matmul
    for h in range(nh):
        q_h = q[:, h * dh:(h + 1) * dh].astype(mxu)                              # (Lq, dh)
        k_h = kv[:, h * dh:(h + 1) * dh].astype(mxu)                             # (Ls, dh)
        v_h = kv[:, ct + h * dh: ct + (h + 1) * dh].astype(mxu)                  # (Ls, dh)
        s = jax.lax.dot_general(q_h, k_h, (((1,), (1,)), ((), ())),
                                preferred_element_type=jnp.float32)              # (Lq, Ls)
        s = s - jnp.max(s, axis=-1, keepdims=True)
        e = jnp.exp(s)
        p = e * pl.reciprocal(jnp.sum(e, axis=-1, keepdims=True), approx=True)
        o_buf[:, h * dh:(h + 1) * dh] = jnp.dot(p.astype(mxu), v_h,
                                                preferred_element_type=jnp.float32)
    o_ref[0, 0] = jnp.dot(o_buf[...].astype(mxu), wo_ref[0],
                          preferred_element_type=jnp.float32) + bo_ref[0]


def attn_chain(y, bn_scale, bn_shift, pos_tok, wkv, bkv, q_tok, wo, bo, nh, mxu):
    P, N, Ls, Cs = y.shape
    _, Nq, Lq, Ct = q_tok.shape
    C2 = wkv.shape[2]
    q_map = (lambda p, n: (p, 0, 0, 0)) if Nq == 1 else (lambda p, n: (p, n, 0, 0))
    return pl.pallas_call(
        functools.partial(_attn_chain_kernel, nh=nh, dh=Ct // nh, ct=Ct, mxu=mxu),
        out_shape=jax.ShapeDtypeStruct((P, N, Lq, Ct), jnp.float32),
        grid=(P, N),                                       # P outer: per-p weights stay resident
        in_specs=[
            pl.BlockSpec((1, 1, Ls, Cs), lambda p, n: (p, n, 0, 0)),   # y (conv output)
            pl.BlockSpec((1, 1, Cs), lambda p, n: (p, 0, 0)),          # BN scale
            pl.BlockSpec((1, 1, Cs), lambda p, n: (p, 0, 0)),          # BN shift
            pl.BlockSpec((1, Ls, Cs), lambda p, n: (p, 0, 0)),         # pos-embed tokens
            pl.BlockSpec((1, Cs, C2), lambda p, n: (p, 0, 0)),         # [Wk | Wv]  (bf16)
            pl.BlockSpec((1, 1, C2), lambda p, n: (p, 0, 0)),          # [bk | bv]
            pl.BlockSpec((1, 1, Lq, Ct), q_map),                       # projected Q (scaled)
            pl.BlockSpec((1, Ct, Ct), lambda p, n: (p, 0, 0)),         # Wo (bf16)
            pl.BlockSpec((1, 1, Ct), lambda p, n: (p, 0, 0)),          # bo
        ],
        out_specs=pl.BlockSpec((1, 1, Lq, Ct), lambda p, n: (p, n, 0, 0)),
        scratch_shapes=[pltpu.VMEM((Lq, Ct), jnp.float32)],
        compiler_params=pltpu.CompilerParams(dimension_semantics=("parallel", "parallel")),
    )(y, bn_scale, bn_shift, pos_tok, wkv, bkv, q_tok, wo, bo)


# ----------------------------------------------------------------------------
# Kernel D: LayerNorm + FFN (Linear-ReLU-Linear) with residual around the FFN input, row-tiled
# ----------------------------------------------------------------------------

def _ln_ffn_kernel(x_ref, g_ref, be_ref, w1_ref, b1_ref, w2_ref, b2_ref, o_ref, *, mxu, eps):
    x = x_ref[0]                                                       # (bm, Ct)
    mu = jnp.mean(x, axis=-1, keepdims=True)
    xc = x - mu
    var = jnp.mean(xc * xc, axis=-1, keepdims=True)
    ln = xc * jax.lax.rsqrt(var + eps) * g_ref[0] + be_ref[0]
    h = jnp.dot(ln.astype(mxu), w1_ref[0], preferred_element_type=jnp.float32) + b1_ref[0]
    h = jnp.maximum(h, 0.0)
    h = jnp.dot(h.astype(mxu), w2_ref[0], preferred_element_type=jnp.float32) + b2_ref[0]
    o_ref[0] = ln + h


def ln_ffn(x, g, b, w1, b1, w2, b2, mxu, row_block=256):
    P, M, Ct = x.shape
    Dff = w1.shape[2]
    bm = _pick_row_block(M, row_block)
    return pl.pallas_call(
        functools.partial(_ln_ffn_kernel, mxu=mxu, eps=1e-5),
        out_shape=jax.ShapeDtypeStruct((P, M, Ct), jnp.float32),
        grid=(P, M // bm),
        in_specs=[
            pl.BlockSpec((1, bm, Ct), lambda p, i: (p, i, 0)),
            pl.BlockSpec((1, 1, Ct), lambda p, i: (p, 0, 0)),
            pl.BlockSpec((1, 1, Ct), lambda p, i: (p, 0, 0)),
            pl.BlockSpec((1, Ct, Dff), lambda p, i: (p, 0, 0)),        # bf16
            pl.BlockSpec((1, 1, Dff), lambda p, i: (p, 0, 0)),
            pl.BlockSpec((1, Dff, Ct), lambda p, i: (p, 0, 0)),        # bf16
            pl.BlockSpec((1, 1, Ct), lambda p, i: (p, 0, 0)),
        ],
        out_specs=pl.BlockSpec((1, bm, Ct), lambda p, i: (p, i, 0)),
        compiler_params=pltpu.CompilerParams(dimension_semantics=("parallel", "parallel")),
    )(x, g, b, w1, b1, w2, b2)


# ----------------------------------------------------------------------------
# Kernel E: fused spat + freq losses, per-batch partials (T read once, no fea transposes)
# DCT(norm=None) -> zero F[0,0] -> IDCT is exactly per-(n,c) spatial-mean removal:
#   F[0,0] = 4*sum(x) and D^{-T} e0 e0^T D^{-1} = (1/(2H))^2 * 11^T  =>  recon = x - mean_{H,W}(x).
# ----------------------------------------------------------------------------

def _dual_loss_kernel(fea_ref, t_ref, sp_ref, fr_ref):
    s_sp = fea_ref[0, 0]                                               # (L, C)
    s_fr = fea_ref[1, 0]
    t = t_ref[0]                                                       # (L, C)
    eps2 = 1e-24                                                       # (F.normalize eps)^2

    def nrm(a):                                                        # normalize over channel (lane)
        return a * jax.lax.rsqrt(jnp.maximum(jnp.sum(a * a, axis=-1, keepdims=True), eps2))

    d = nrm(s_sp) - nrm(t)
    sp_ref[...] = jnp.zeros_like(sp_ref) + jnp.sum(d * d)

    s_c = s_fr - jnp.mean(s_fr, axis=0, keepdims=True)                 # DC removal == spatial mean sub
    t_c = t - jnp.mean(t, axis=0, keepdims=True)
    d2 = nrm(s_c) - nrm(t_c)
    fr_ref[...] = jnp.zeros_like(fr_ref) + jnp.sum(d2 * d2)


def dual_loss(fea, t_lc):
    P, N, L, C = fea.shape
    return pl.pallas_call(
        _dual_loss_kernel,
        out_shape=(jax.ShapeDtypeStruct((N, 1, 1), jnp.float32),
                   jax.ShapeDtypeStruct((N, 1, 1), jnp.float32)),
        grid=(N,),
        in_specs=[
            pl.BlockSpec((2, 1, L, C), lambda n: (0, n, 0, 0)),        # both projector outputs
            pl.BlockSpec((1, L, C), lambda n: (n, 0, 0)),              # teacher, (L, C) layout
        ],
        out_specs=(pl.BlockSpec((1, 1, 1), lambda n: (n, 0, 0)),
                   pl.BlockSpec((1, 1, 1), lambda n: (n, 0, 0))),
        compiler_params=pltpu.CompilerParams(dimension_semantics=("parallel",)),
    )(fea, t_lc)


# ----------------------------------------------------------------------------
# Parameter init (deterministic, PyTorch-default-like) + module
# ----------------------------------------------------------------------------

def _init_projector_raw(key, Cs, Ct, query_hw, pos_hw, self_query):
    keys = jax.random.split(key, 10)
    p = {}
    w, b = _dense_init(keys[0], 9 * Cs, Cs)                            # Conv2d(Cs, Cs, 3, padding=1)
    p['conv_w'] = w                                                    # (9*Cs, Cs) (kh,kw,cin)-major
    p['conv_b'] = b                                                    # (1, Cs)
    p['bn_g'] = jnp.ones((Cs,), jnp.float32)
    p['bn_b'] = jnp.zeros((Cs,), jnp.float32)
    p['pos_embed'] = 0.02 * jax.random.truncated_normal(
        keys[1], -2.0, 2.0, (Cs, pos_hw[0], pos_hw[1]), jnp.float32)
    p['pos_w'], p['pos_b'] = _dense_init(keys[2], Ct, Ct)              # proj_pos: Conv2d(Ct, Ct, 1)
    p['query_weight'] = (jax.random.normal(keys[3], (query_hw[0] * query_hw[1], Ct), jnp.float32)
                         if self_query else None)                      # nn.Embedding default N(0,1)
    p['wq'], p['bq'] = _dense_init(keys[4], Ct, Ct)
    wk, bk = _dense_init(keys[5], Cs, Ct)
    wv, bv = _dense_init(keys[6], Cs, Ct)
    p['wkv'] = jnp.concatenate([wk, wv], axis=1)
    p['bkv'] = jnp.concatenate([bk, bv], axis=1)
    p['wo'], p['bo'] = _dense_init(keys[7], Ct, Ct)
    p['ln_g'] = jnp.ones((1, Ct), jnp.float32)
    p['ln_b'] = jnp.zeros((1, Ct), jnp.float32)
    p['ffn_w1'], p['ffn_b1'] = _dense_init(keys[8], Ct, 4 * Ct)
    p['ffn_w2'], p['ffn_b2'] = _dense_init(keys[9], 4 * Ct, Ct)
    return p


class FreqMaskingDistillLossPallas:
    def __init__(self, alpha_jfd, student_dims, teacher_dims, query_hw, pos_hw,
                 pos_dims, window_shapes=(1, 1), self_query=True,
                 softmax_scale=(1.0, 1.0), num_heads=8, dis_freq='high',
                 mxu_dtype=jnp.bfloat16, *, key):
        # TODO(synk): window_shapes != (1,1) and pos_dims unused (WindowMultiheadPosAttention source
        # not provided); dis_freq stored but, as in the reference forward, unused.
        # Set mxu_dtype=jnp.float32 for exact-f32 matmul parity with the PyTorch reference.
        self.alpha_jfd = alpha_jfd
        self.dis_freq = dis_freq
        self.mxu_dtype = mxu_dtype
        self.query_hw = tuple(query_hw)
        self.student_dims = student_dims
        self.teacher_dims = teacher_dims
        self.num_heads = num_heads

        Cs, Ct = student_dims, teacher_dims
        dh = Ct // num_heads
        k0, k1 = jax.random.split(key)
        raw = [_init_projector_raw(k0, Cs, Ct, query_hw, pos_hw, self_query),
               _init_projector_raw(k1, Cs, Ct, query_hw, pos_hw, self_query)]
        mxu = mxu_dtype
        scales = [float(softmax_scale[0]) / float(np.sqrt(dh)),
                  float(softmax_scale[1]) / float(np.sqrt(dh))]

        # --- stacked / pre-cast parameters (weights in bf16, epilogue params in f32) ---
        self.conv_w = jnp.concatenate([r['conv_w'] for r in raw], axis=1).astype(mxu)   # (9Cs, 2Cs)
        self.conv_b = jnp.concatenate([r['conv_b'] for r in raw], axis=1)               # (1, 2Cs)
        self.bn_g = jnp.concatenate([r['bn_g'] for r in raw])                           # (2Cs,)
        self.bn_b = jnp.concatenate([r['bn_b'] for r in raw])
        Lpos = pos_hw[0] * pos_hw[1]
        self.pos_tok = jnp.stack([jnp.transpose(r['pos_embed'], (1, 2, 0)).reshape(Lpos, Cs)
                                  for r in raw])                                         # (2, Lpos, Cs)
        self.wp = jnp.stack([r['pos_w'] for r in raw]).astype(mxu)                       # (2, Ct, Ct)
        self.bp = jnp.stack([r['pos_b'] for r in raw])
        # softmax scale folded into the Q projection
        self.wq = jnp.stack([r['wq'] * s for r, s in zip(raw, scales)]).astype(mxu)
        self.bq = jnp.stack([r['bq'] * s for r, s in zip(raw, scales)])
        self.wkv = jnp.stack([r['wkv'] for r in raw]).astype(mxu)                        # (2, Cs, 2Ct)
        self.bkv = jnp.stack([r['bkv'] for r in raw])
        self.wo = jnp.stack([r['wo'] for r in raw]).astype(mxu)
        self.bo = jnp.stack([r['bo'] for r in raw])
        self.ln_g = jnp.stack([r['ln_g'] for r in raw])
        self.ln_b = jnp.stack([r['ln_b'] for r in raw])
        self.w1 = jnp.stack([r['ffn_w1'] for r in raw]).astype(mxu)
        self.b1 = jnp.stack([r['ffn_b1'] for r in raw])
        self.w2 = jnp.stack([r['ffn_w2'] for r in raw]).astype(mxu)
        self.b2 = jnp.stack([r['ffn_b2'] for r in raw])
        self.query_weight = (jnp.stack([r['query_weight'] for r in raw])
                             if self_query else None)                                    # (2, Lq, Ct)

        # self-query Q chain depends only on parameters -> hoist it out of the hot path
        if self_query:
            qin = self.query_weight[:, None]                                             # (2, 1, Lq, Ct)
            self.q_cached = q_chain(qin, self.wp, self.bp, self.wq, self.bq, mxu)
        else:
            self.q_cached = None

    def __call__(self, preds_S, preds_T, query_s=None, query_f=None):
        mxu = self.mxu_dtype
        N, Cs, H, W = preds_S.shape
        Nt, C, Ht, Wt = preds_T.shape
        Lq = self.query_hw[0] * self.query_hw[1]
        Ct = self.teacher_dims
        assert C == Ct and Ht * Wt == Lq
        assert Ht == Wt, "the reference DCT assumes square feature maps"

        # ---- query tokens (proj_pos + ReLU + Q proj); cached when self_query ----
        if query_s is None and query_f is None and self.q_cached is not None:
            q_tok = self.q_cached                                                 # (2, 1, Lq, Ct)
        else:
            def prep(q, p):
                if q is not None:
                    return q.astype(jnp.float32)
                if self.query_weight is None:
                    raise NotImplementedError('There is no query!')
                return jnp.broadcast_to(self.query_weight[p][None], (N, Lq, Ct))
            qin = jnp.stack([prep(query_s, 0), prep(query_f, 1)])                 # (2, N, Lq, Ct)
            q_tok = q_chain(qin, self.wp, self.bp, self.wq, self.bq, mxu)

        # ---- dual-projector 3x3 conv (single im2col matmul) + partial BN stats ----
        # TODO(synk): the halo pad could move in-kernel to avoid this extra HBM pass over preds_S.
        x_nhwc = jnp.transpose(preds_S, (0, 2, 3, 1))
        xpad = jnp.pad(x_nhwc, ((0, 0), (1, 1), (1, 1), (0, 0)))
        y, stats = conv3x3_dual(xpad, self.conv_w, self.conv_b, H, W, Cs, mxu)    # (2,N,L,Cs),(N,2,2Cs)

        # ---- BatchNorm (train-mode batch statistics) folded to scale/shift ----
        tot = jnp.sum(stats, axis=0)                                              # (2, 2Cs)
        cnt = float(N * H * W)
        mean = tot[0] / cnt
        var = jnp.maximum(tot[1] / cnt - mean * mean, 0.0)
        scale = self.bn_g * jax.lax.rsqrt(var + 1e-5)
        shift = self.bn_b - mean * scale
        bn_scale = scale.reshape(2, 1, Cs)
        bn_shift = shift.reshape(2, 1, Cs)

        # ---- fused BN-apply + ReLU + pos + K|V proj + attention + out-proj ----
        feaC = attn_chain(y, bn_scale, bn_shift, self.pos_tok, self.wkv, self.bkv,
                          q_tok, self.wo, self.bo, self.num_heads, mxu)           # (2, N, Lq, Ct)

        # ---- LayerNorm + FFN (+ residual around the FFN input), row-tiled ----
        fea = ln_ffn(feaC.reshape(2, N * Lq, Ct), self.ln_g, self.ln_b,
                     self.w1, self.b1, self.w2, self.b2, mxu).reshape(2, N, Lq, Ct)

        # ---- fused spat + freq losses, per-batch partials summed outside ----
        t_lc = jnp.transpose(preds_T.reshape(N, Ct, Lq), (0, 2, 1)).astype(jnp.float32)
        sp_part, fr_part = dual_loss(fea, t_lc)
        spat_loss = jnp.sum(sp_part) / N * self.alpha_jfd[0]
        freq_loss = jnp.sum(fr_part) / N * self.alpha_jfd[1]
        return spat_loss, freq_loss


# ----------------------------------------------------------------------------
# Example run
# ----------------------------------------------------------------------------

if __name__ == "__main__":
    root_key = jax.random.PRNGKey(0)
    key_params, key_s, key_t = jax.random.split(root_key, 3)

    N = 2
    student_dims = 16
    teacher_dims = 32
    H = W = 8
    query_hw = (8, 8)
    pos_hw = (8, 8)

    loss_mod = FreqMaskingDistillLossPallas(
        alpha_jfd=(0.08, 0.06),
        student_dims=student_dims,
        teacher_dims=teacher_dims,
        query_hw=query_hw,
        pos_hw=pos_hw,
        pos_dims=teacher_dims,
        window_shapes=(1, 1),
        self_query=True,
        softmax_scale=(1.0, 5.0),
        num_heads=4,
        dis_freq='high',
        key=key_params,
    )

    preds_S = jax.random.normal(key_s, (N, student_dims, H, W), jnp.float32)
    preds_T = jax.random.normal(key_t, (N, teacher_dims, query_hw[0], query_hw[1]), jnp.float32)

    fwd = jax.jit(lambda s, t: loss_mod(s, t))
    spat_loss, freq_loss = fwd(preds_S, preds_T)
    jax.block_until_ready((spat_loss, freq_loss))
    assert jnp.isfinite(spat_loss) and jnp.isfinite(freq_loss)
    print("KERNEL_OK")
</pallas_src>

<mosaic_0001>
module attributes {stable_mosaic.version = 11 : i64} {
  func.func @_q_chain_kernel(%arg0: i32, %arg1: i32, %arg2: memref<1x1x64x32xf32, #tpu.memory_space<vmem>>, %arg3: memref<1x32x32xbf16, #tpu.memory_space<vmem>>, %arg4: memref<1x1x32xf32, #tpu.memory_space<vmem>>, %arg5: memref<1x32x32xbf16, #tpu.memory_space<vmem>>, %arg6: memref<1x1x32xf32, #tpu.memory_space<vmem>>, %arg7: memref<1x1x64x32xf32, #tpu.memory_space<vmem>>) attributes {dimension_semantics = [#tpu.dimension_semantics<parallel>, #tpu.dimension_semantics<parallel>], iteration_bounds = array<i64: 2, 1>, scalar_prefetch = 0 : i64, scratch_operands = 0 : i64, tpu.core_type = #tpu.core_type<tc>, window_params = [{transform_indices = @transform_0, window_bounds = array<i64: 1, 1, 64, 32>}, {transform_indices = @transform_1, window_bounds = array<i64: 1, 32, 32>}, {transform_indices = @transform_2, window_bounds = array<i64: 1, 1, 32>}, {transform_indices = @transform_3, window_bounds = array<i64: 1, 32, 32>}, {transform_indices = @transform_4, window_bounds = array<i64: 1, 1, 32>}, {transform_indices = @transform_5, window_bounds = array<i64: 1, 1, 64, 32>}]} {
    %c0 = arith.constant 0 : index
    %c0_0 = arith.constant 0 : index
    %c0_1 = arith.constant 0 : index
    %c0_2 = arith.constant 0 : index
    %0 = vector.load %arg2[%c0, %c0_0, %c0_1, %c0_2] : memref<1x1x64x32xf32, #tpu.memory_space<vmem>>, vector<1x1x64x32xf32>
    %1 = vector.shape_cast %0 : vector<1x1x64x32xf32> to vector<64x32xf32>
    %2 = arith.truncf %1 : vector<64x32xf32> to vector<64x32xbf16>
    %c0_3 = arith.constant 0 : index
    %c0_4 = arith.constant 0 : index
    %c0_5 = arith.constant 0 : index
    %3 = vector.load %arg3[%c0_3, %c0_4, %c0_5] : memref<1x32x32xbf16, #tpu.memory_space<vmem>>, vector<1x32x32xbf16>
    %4 = vector.shape_cast %3 : vector<1x32x32xbf16> to vector<32x32xbf16>
    %cst = arith.constant dense<0.000000e+00> : vector<64x32xf32>
    %5 = tpu.matmul %2, %4, %cst {dimension_numbers = #tpu.dot_dimension_numbers<[1], [0], [0], [1], [0, 0, 1, 1], [], []>} : vector<64x32xbf16>, vector<32x32xbf16>, vector<64x32xf32> -> vector<64x32xf32>
    %c0_6 = arith.constant 0 : index
    %c0_7 = arith.constant 0 : index
    %c0_8 = arith.constant 0 : index
    %6 = vector.load %arg4[%c0_6, %c0_7, %c0_8] : memref<1x1x32xf32, #tpu.memory_space<vmem>>, vector<1x1x32xf32>
    %7 = vector.shape_cast %6 : vector<1x1x32xf32> to vector<1x32xf32>
    %8 = vector.broadcast %7 : vector<1x32xf32> to vector<64x32xf32>
    %9 = arith.addf %5, %8 : vector<64x32xf32>
    %cst_9 = arith.constant 0.000000e+00 : f32
    %10 = vector.broadcast %cst_9 : f32 to vector<64x32xf32>
    %11 = arith.maximumf %9, %10 : vector<64x32xf32>
    %12 = arith.truncf %11 : vector<64x32xf32> to vector<64x32xbf16>
    %c0_10 = arith.constant 0 : index
    %c0_11 = arith.constant 0 : index
    %c0_12 = arith.constant 0 : index
    %13 = vector.load %arg5[%c0_10, %c0_11, %c0_12] : memref<1x32x32xbf16, #tpu.memory_space<vmem>>, vector<1x32x32xbf16>
    %14 = vector.shape_cast %13 : vector<1x32x32xbf16> to vector<32x32xbf16>
    %cst_13 = arith.constant dense<0.000000e+00> : vector<64x32xf32>
    %15 = tpu.matmul %12, %14, %cst_13 {dimension_numbers = #tpu.dot_dimension_numbers<[1], [0], [0], [1], [0, 0, 1, 1], [], []>} : vector<64x32xbf16>, vector<32x32xbf16>, vector<64x32xf32> -> vector<64x32xf32>
    %c0_14 = arith.constant 0 : index
    %c0_15 = arith.constant 0 : index
    %c0_16 = arith.constant 0 : index
    %16 = vector.load %arg6[%c0_14, %c0_15, %c0_16] : memref<1x1x32xf32, #tpu.memory_space<vmem>>, vector<1x1x32xf32>
    %17 = vector.shape_cast %16 : vector<1x1x32xf32> to vector<1x32xf32>
    %18 = vector.broadcast %17 : vector<1x32xf32> to vector<64x32xf32>
    %19 = arith.addf %15, %18 : vector<64x32xf32>
    %c0_17 = arith.constant 0 : index
    %c0_18 = arith.constant 0 : index
    %c0_19 = arith.constant 0 : index
    %c0_20 = arith.constant 0 : index
    %20 = vector.load %arg7[%c0_17, %c0_18, %c0_19, %c0_20] : memref<1x1x64x32xf32, #tpu.memory_space<vmem>>, vector<1x1x64x32xf32>
    %21 = vector.shape_cast %20 : vector<1x1x64x32xf32> to vector<64x32xf32>
    %22 = vector.shape_cast %19 : vector<64x32xf32> to vector<1x1x64x32xf32>
    tpu.vector_store %arg7[%c0_17, %c0_18, %c0_19, %c0_20], %22 {strides = array<i32>} : memref<1x1x64x32xf32, #tpu.memory_space<vmem>>, vector<1x1x64x32xf32>,
    return
  }
  func.func @transform_0(%arg0: i32, %arg1: i32) -> (i32, i32, i32, i32) {
    %c0_i32 = arith.constant 0 : i32
    %c0_i32_0 = arith.constant 0 : i32
    %c0_i32_1 = arith.constant 0 : i32
    return %arg0, %arg1, %c0_i32, %c0_i32_0 : i32, i32, i32, i32
  }
  func.func @transform_1(%arg0: i32, %arg1: i32) -> (i32, i32, i32) {
    %c0_i32 = arith.constant 0 : i32
    %c0_i32_0 = arith.constant 0 : i32
    %c0_i32_1 = arith.constant 0 : i32
    return %arg0, %c0_i32, %c0_i32_0 : i32, i32, i32
  }
  func.func @transform_2(%arg0: i32, %arg1: i32) -> (i32, i32, i32) {
    %c0_i32 = arith.constant 0 : i32
    %c0_i32_0 = arith.constant 0 : i32
    %c0_i32_1 = arith.constant 0 : i32
    return %arg0, %c0_i32, %c0_i32_0 : i32, i32, i32
  }
  func.func @transform_3(%arg0: i32, %arg1: i32) -> (i32, i32, i32) {
    %c0_i32 = arith.constant 0 : i32
    %c0_i32_0 = arith.constant 0 : i32
    %c0_i32_1 = arith.constant 0 : i32
    return %arg0, %c0_i32, %c0_i32_0 : i32, i32, i32
  }
  func.func @transform_4(%arg0: i32, %arg1: i32) -> (i32, i32, i32) {
    %c0_i32 = arith.constant 0 : i32
    %c0_i32_0 = arith.constant 0 : i32
    %c0_i32_1 = arith.constant 0 : i32
    return %arg0, %c0_i32, %c0_i32_0 : i32, i32, i32
  }
  func.func @transform_5(%arg0: i32, %arg1: i32) -> (i32, i32, i32, i32) {
    %c0_i32 = arith.constant 0 : i32
    %c0_i32_0 = arith.constant 0 : i32
    %c0_i32_1 = arith.constant 0 : i32
    return %arg0, %arg1, %c0_i32, %c0_i32_0 : i32, i32, i32, i32
  }
}

</mosaic_0001>

<llo_original>
// kernel: tpu_custom_call.1
$region0: #{tpu_custom_call.1}
  #allocation0 [shape = 'u32[]', space=smem, size = 0x4, offset = 0x4, fixed_abs, tag = 'smem constant byte address 0x4 - core index']
  #allocation1 [shape = 'u32[72,128]{1,0:T(1,128)}', space=vmem, size = 0x9000, scoped, tag = 'internal scratch']
  %s0 = inlined_call_operand.vmem [shape: f32[2,1,64,32], index: 0, kind: input, shape index: {}]
  %s1 = inlined_call_operand.vmem [shape: bf16[2,32,32], index: 1, kind: input, shape index: {}]
  %s2 = inlined_call_operand.vmem [shape: f32[2,1,32], index: 2, kind: input, shape index: {}]
  %s3 = inlined_call_operand.vmem [shape: bf16[2,32,32], index: 3, kind: input, shape index: {}]
  %s4 = inlined_call_operand.vmem [shape: f32[2,1,32], index: 4, kind: input, shape index: {}]
  %s5 = inlined_call_operand.vmem [shape: f32[2,1,64,32], index: 5, kind: output, shape index: {}]
  %s6 = sld [smem:[#allocation0]]
  $region53: #{tpu_custom_call.1} parent=0
    _
  %s8 = ssub.s32 1, %s6
  %s9 = scalar_select 0, %s8, %s6
  loop: start=0, step=1, limit=4
  $region2: #{tpu_custom_call.1} parent=0 // loop_pre_header
    _
  $region3: #{tpu_custom_call.1} parent=0 // loop_header
    %s11 = sphi 0, %s15
    %p12 = scmp.ge.s32.totalorder %s11, 4
    %s18 = sphi 0, %s30
    %s19 = sphi 0, %s26
    %s20 = sphi 0, %s18
    %s21 = sphi 0, %s19
    %s22 = sphi 0, %s20
    %s23 = sphi 0, %s21
    %s35 = sphi 0, %s37
    %s38 = sphi 0, %s35
    %s39 = sphi 0, %s38
    %s55 = sphi 0, %s39
    %s61 = sphi 0, %s63
    %s64 = sphi 0, %s61
    %s65 = sphi 0, %s64
    %s81 = sphi 0, %s65
    %s87 = sphi 0, %s89
    %s90 = sphi 0, %s87
    %s91 = sphi 0, %s90
    %s107 = sphi 0, %s91
    %s113 = sphi 0, %s115
    %s116 = sphi 0, %s113
    %s117 = sphi 0, %s116
    %s133 = sphi 0, %s117
    %s139 = sphi 0, %s141
    %s142 = sphi 0, %s139
    %s143 = sphi 0, %s142
    %s159 = sphi 0, %s143
    %s167 = sphi 0, %s169
    %s170 = sphi 0, %s167
    %s171 = sphi 0, %s170
    %s187 = sphi 0, %s171
  $region4: #{tpu_custom_call.1} parent=0 // loop_header_branch
    %14 = sbr.rel (%p12) target = $region8
  $region5: #{tpu_custom_call.1} parent=0 // loop_body
    %s16 = ssub.s32 %s11, 1
    %s17 = ssub.s32 %s11, 2
    %s24 = sadd.s32 1, %s19
    %p25 = scmp.ge.s32.totalorder %s24, 1
    %s26 = scalar_select %p25, 0, %s24
    %s27 = sadd.s32 1, %s18
    %s28 = scalar_select %p25, %s27, %s18
    %p29 = scmp.ge.s32.totalorder %s28, 2
    %s30 = scalar_select %p29, 0, %s28
    %s31 = ssub.s32 %s18, %s30
    %s32 = ssub.s32 %s19, %s26
    %s33 = sor.u32 %s31, %s32
    %p34 = scmp.eq.s32.totalorder %s33, 0
    %s36 = sadd.s32 %s35, 1
    %s37 = scalar_select %p34, %s35, %s36
    %p40 = pneg %p34
    %p41 = scmp.eq.s32.totalorder %s11, 1
    %p42 = por %p40, %p41
    %p43 = scmp.ne.s32.totalorder %s35, %s38
    %p44 = scmp.eq.s32.totalorder %s11, 0
    %p45 = por %p43, %p44
    %p46 = scmp.ne.s32.totalorder %s35, %s38
    %p47 = scmp.eq.s32.totalorder %s16, 1
    %p48 = por %p46, %p47
    %p49 = scmp.ne.s32.totalorder %s38, %s39
    %p50 = scmp.eq.s32.totalorder %s16, 0
    %p51 = por %p49, %p50
    %p52 = scmp.ne.s32.totalorder %s38, %s39
    %p53 = scmp.eq.s32.totalorder %s17, 1
    %p54 = por %p52, %p53
    %p56 = scmp.ne.s32.totalorder %s39, %s55
    %p57 = scmp.eq.s32.totalorder %s17, 0
    %p58 = por %p56, %p57
    %s59 = ssub.s32 %s18, %s30
    %p60 = scmp.eq.s32.totalorder %s59, 0
    %s62 = sadd.s32 %s61, 1
    %s63 = scalar_select %p60, %s61, %s62
    %p66 = pneg %p60
    %p67 = scmp.eq.s32.totalorder %s11, 1
    %p68 = por %p66, %p67
    %p69 = scmp.ne.s32.totalorder %s61, %s64
    %p70 = scmp.eq.s32.totalorder %s11, 0
    %p71 = por %p69, %p70
    %p72 = scmp.ne.s32.totalorder %s61, %s64
    %p73 = scmp.eq.s32.totalorder %s16, 1
    %p74 = por %p72, %p73
    %p75 = scmp.ne.s32.totalorder %s64, %s65
    %p76 = scmp.eq.s32.totalorder %s16, 0
    %p77 = por %p75, %p76
    %p78 = scmp.ne.s32.totalorder %s64, %s65
    %p79 = scmp.eq.s32.totalorder %s17, 1
    %p80 = por %p78, %p79
    %p82 = scmp.ne.s32.totalorder %s65, %s81
    %p83 = scmp.eq.s32.totalorder %s17, 0
    %p84 = por %p82, %p83
    %s85 = ssub.s32 %s18, %s30
    %p86 = scmp.eq.s32.totalorder %s85, 0
    %s88 = sadd.s32 %s87, 1
    %s89 = scalar_select %p86, %s87, %s88
    %p92 = pneg %p86
    %p93 = scmp.eq.s32.totalorder %s11, 1
    %p94 = por %p92, %p93
    %p95 = scmp.ne.s32.totalorder %s87, %s90
    %p96 = scmp.eq.s32.totalorder %s11, 0
    %p97 = por %p95, %p96
    %p98 = scmp.ne.s32.totalorder %s87, %s90
    %p99 = scmp.eq.s32.totalorder %s16, 1
    %p100 = por %p98, %p99
    %p101 = scmp.ne.s32.totalorder %s90, %s91
    %p102 = scmp.eq.s32.totalorder %s16, 0
    %p103 = por %p101, %p102
    %p104 = scmp.ne.s32.totalorder %s90, %s91
    %p105 = scmp.eq.s32.totalorder %s17, 1
    %p106 = por %p104, %p105
    %p108 = scmp.ne.s32.totalorder %s91, %s107
    %p109 = scmp.eq.s32.totalorder %s17, 0
    %p110 = por %p108, %p109
    %s111 = ssub.s32 %s18, %s30
    %p112 = scmp.eq.s32.totalorder %s111, 0
    %s114 = sadd.s32 %s113, 1
    %s115 = scalar_select %p112, %s113, %s114
    %p118 = pneg %p112
    %p119 = scmp.eq.s32.totalorder %s11, 1
    %p120 = por %p118, %p119
    %p121 = scmp.ne.s32.totalorder %s113, %s116
    %p122 = scmp.eq.s32.totalorder %s11, 0
    %p123 = por %p121, %p122
    %p124 = scmp.ne.s32.totalorder %s113, %s116
    %p125 = scmp.eq.s32.totalorder %s16, 1
    %p126 = por %p124, %p125
    %p127 = scmp.ne.s32.totalorder %s116, %s117
    %p128 = scmp.eq.s32.totalorder %s16, 0
    %p129 = por %p127, %p128
    %p130 = scmp.ne.s32.totalorder %s116, %s117
    %p131 = scmp.eq.s32.totalorder %s17, 1
    %p132 = por %p130, %p131
    %p134 = scmp.ne.s32.totalorder %s117, %s133
    %p135 = scmp.eq.s32.totalorder %s17, 0
    %p136 = por %p134, %p135
    %s137 = ssub.s32 %s18, %s30
    %p138 = scmp.eq.s32.totalorder %s137, 0
    %s140 = sadd.s32 %s139, 1
    %s141 = scalar_select %p138, %s139, %s140
    %p144 = pneg %p138
    %p145 = scmp.eq.s32.totalorder %s11, 1
    %p146 = por %p144, %p145
    %p147 = scmp.ne.s32.totalorder %s139, %s142
    %p148 = scmp.eq.s32.totalorder %s11, 0
    %p149 = por %p147, %p148
    %p150 = scmp.ne.s32.totalorder %s139, %s142
    %p151 = scmp.eq.s32.totalorder %s16, 1
    %p152 = por %p150, %p151
    %p153 = scmp.ne.s32.totalorder %s142, %s143
    %p154 = scmp.eq.s32.totalorder %s16, 0
    %p155 = por %p153, %p154
    %p156 = scmp.ne.s32.totalorder %s142, %s143
    %p157 = scmp.eq.s32.totalorder %s17, 1
    %p158 = por %p156, %p157
    %p160 = scmp.ne.s32.totalorder %s143, %s159
    %p161 = scmp.eq.s32.totalorder %s17, 0
    %p162 = por %p160, %p161
    %s163 = ssub.s32 %s18, %s30
    %s164 = ssub.s32 %s19, %s26
    %s165 = sor.u32 %s163, %s164
    %p166 = scmp.eq.s32.totalorder %s165, 0
    %s168 = sadd.s32 %s167, 1
    %s169 = scalar_select %p166, %s167, %s168
    %p172 = pneg %p166
    %p173 = scmp.eq.s32.totalorder %s11, 1
    %p174 = por %p172, %p173
    %p175 = scmp.ne.s32.totalorder %s167, %s170
    %p176 = scmp.eq.s32.totalorder %s11, 0
    %p177 = por %p175, %p176
    %p178 = scmp.ne.s32.totalorder %s167, %s170
    %p179 = scmp.eq.s32.totalorder %s16, 1
    %p180 = por %p178, %p179
    %p181 = scmp.ne.s32.totalorder %s170, %s171
    %p182 = scmp.eq.s32.totalorder %s16, 0
    %p183 = por %p181, %p182
    %p184 = scmp.ne.s32.totalorder %s170, %s171
    %p185 = scmp.eq.s32.totalorder %s17, 1
    %p186 = por %p184, %p185
    %p188 = scmp.ne.s32.totalorder %s171, %s187
    %p189 = scmp.eq.s32.totalorder %s17, 0
    %p190 = por %p188, %p189
    %p191 = scmp.le.s32.totalorder 1, %s11
    %p192 = scmp.lt.s32.totalorder %s11, 3
    %p193 = pnand %p191, %p192
    %p194 = pneg %p193
    // Predicated region
    $region9: #{tpu_custom_call.1} parent=5 // pred_check
      _
    $region10: #{tpu_custom_call.1} parent=5 // pred_check_branch
      %196 = sbr.rel (%p193) target = $region12
    $region11: #{tpu_custom_call.1} parent=5 // pred_region
      %s197 = ssub.s32 %s11, 1
    $region12: #{tpu_custom_call.1} parent=5 // pred_fallthru
      _
    %p198 = scmp.lt.s32.totalorder %s11, 2
    // Predicated region
    $region13: #{tpu_custom_call.1} parent=5 // pred_check
      %p199 = pneg %p198
    $region14: #{tpu_custom_call.1} parent=5 // pred_check_branch
      %201 = sbr.rel (%p199) target = $region16
    $region15: #{tpu_custom_call.1} parent=5 // pred_region
      // Predicated region
      $region17: #{tpu_custom_call.1} parent=15 // pred_check
        %p202 = pneg %p45
      $region18: #{tpu_custom_call.1} parent=15 // pred_check_branch
        %204 = sbr.rel (%p202) target = $region20
      $region19: #{tpu_custom_call.1} parent=15 // pred_region
        %p205 = scmp.lt.s32.totalorder %s18, 1
        %s206 = scalar_select %p205, %s18, 1
        %p207 = scmp.lt.s32.totalorder %s19, 0
        %s208 = scalar_select %p207, %s19, 0
        %s209 = smul.addr %s208, 8
        %s210 = smul.addr %s206, 8
        %s211 = sadd.s32 %s209, %s210
        %s212 = smul.addr %s211, 8
        %s213 = scalar_lea.vmem %s0, %s212
      $region20: #{tpu_custom_call.1} parent=15 // pred_fallthru
        _
      // Predicated region
      $region21: #{tpu_custom_call.1} parent=15 // pred_check
        %p214 = pneg %p71
      $region22: #{tpu_custom_call.1} parent=15 // pred_check_branch
        %216 = sbr.rel (%p214) target = $region24
      $region23: #{tpu_custom_call.1} parent=15 // pred_region
        %p217 = scmp.lt.s32.totalorder %s18, 1
        %s218 = scalar_select %p217, %s18, 1
        %s219 = smul.addr %s218, 4
        %s220 = smul.addr %s219, 4
        %s221 = scalar_lea.vmem %s1, %s220
      $region24: #{tpu_custom_call.1} parent=15 // pred_fallthru
        _
      // Predicated region
      $region25: #{tpu_custom_call.1} parent=15 // pred_check
        %p222 = pneg %p97
      $region26: #{tpu_custom_call.1} parent=15 // pred_check_branch
        %224 = sbr.rel (%p222) target = $region28
      $region27: #{tpu_custom_call.1} parent=15 // pred_region
        %p225 = scmp.lt.s32.totalorder %s18, 1
        %s226 = scalar_select %p225, %s18, 1
        %s227 = scalar_lea.vmem %s2, %s226
      $region28: #{tpu_custom_call.1} parent=15 // pred_fallthru
        _
      // Predicated region
      $region29: #{tpu_custom_call.1} parent=15 // pred_check
        %p228 = pneg %p123
      $region30: #{tpu_custom_call.1} parent=15 // pred_check_branch
        %230 = sbr.rel (%p228) target = $region32
      $region31: #{tpu_custom_call.1} parent=15 // pred_region
        %p231 = scmp.lt.s32.totalorder %s18, 1
        %s232 = scalar_select %p231, %s18, 1
        %s233 = smul.addr %s232, 4
        %s234 = smul.addr %s233, 4
        %s235 = scalar_lea.vmem %s3, %s234
      $region32: #{tpu_custom_call.1} parent=15 // pred_fallthru
        _
      // Predicated region
      $region33: #{tpu_custom_call.1} parent=15 // pred_check
        %p236 = pneg %p149
      $region34: #{tpu_custom_call.1} parent=15 // pred_check_branch
        %238 = sbr.rel (%p236) target = $region36
      $region35: #{tpu_custom_call.1} parent=15 // pred_region
        %p239 = scmp.lt.s32.totalorder %s18, 1
        %s240 = scalar_select %p239, %s18, 1
        %s241 = scalar_lea.vmem %s4, %s240
      $region36: #{tpu_custom_call.1} parent=15 // pred_fallthru
        _
    $region16: #{tpu_custom_call.1} parent=5 // pred_fallthru
      _
    %p242 = scmp.le.s32.totalorder 1, %s11
    %p243 = scmp.lt.s32.totalorder %s11, 3
    %p244 = pnand %p242, %p243
    %p245 = pneg %p244
    // Predicated region
    $region37: #{tpu_custom_call.1} parent=5 // pred_check
      _
    $region38: #{tpu_custom_call.1} parent=5 // pred_check_branch
      %247 = sbr.rel (%p244) target = $region40
    $region39: #{tpu_custom_call.1} parent=5 // pred_region
      %s248 = ssub.s32 %s11, 1
      %p249 = scmp.lt.s32.totalorder %s20, 1
      %s250 = scalar_select %p249, %s20, 1
      %p251 = scmp.lt.s32.totalorder %s21, 0
      %s252 = scalar_select %p251, %s21, 0
      %s253 = smul.addr %s252, 8
      %s254 = smul.addr %s250, 8
      %s255 = sadd.s32 %s253, %s254
      %s256 = smul.addr %s255, 8
      %s257 = scalar_lea.vmem %s0, %s256
      %p258 = pneg %p51
      %p259 = pneg %p48
      %p260 = scmp.lt.s32.totalorder %s20, 1
      %s261 = scalar_select %p260, %s20, 1
      %s262 = smul.addr %s261, 4
      %s263 = smul.addr %s262, 4
      %s264 = scalar_lea.vmem %s1, %s263
      %p265 = pneg %p77
      %p266 = pneg %p74
      %p267 = scmp.lt.s32.totalorder %s20, 1
      %s268 = scalar_select %p267, %s20, 1
      %s269 = scalar_lea.vmem %s2, %s268
      %p270 = pneg %p103
      %p271 = pneg %p100
      %p272 = scmp.lt.s32.totalorder %s20, 1
      %s273 = scalar_select %p272, %s20, 1
      %s274 = smul.addr %s273, 4
      %s275 = smul.addr %s274, 4
      %s276 = scalar_lea.vmem %s3, %s275
      %p277 = pneg %p129
      %p278 = pneg %p126
      %p279 = scmp.lt.s32.totalorder %s20, 1
      %s280 = scalar_select %p279, %s20, 1
      %s281 = scalar_lea.vmem %s4, %s280
      %p282 = pneg %p155
      %p283 = pneg %p152
      %p284 = pneg %p183
      %p285 = pneg %p180
      %p286 = scmp.lt.s32.totalorder %s20, 1
      %s287 = scalar_select %p286, %s20, 1
      %p288 = scmp.lt.s32.totalorder %s21, 0
      %s289 = scalar_select %p288, %s21, 0
      %s290 = smul.addr %s289, 8
      %s291 = smul.addr %s287, 8
      %s292 = sadd.s32 %s290, %s291
      %s293 = smul.addr %s292, 8
      %s294 = scalar_lea.vmem %s5, %s293
      %p295 = scmp.lt.s32.totalorder %s20, 1
      %s296 = scalar_select %p295, %s20, 1
      %p297 = scmp.lt.s32.totalorder %s21, 0
      %s298 = scalar_select %p297, %s21, 0
      %s299 = smul.addr %s298, 8
      %s300 = smul.addr %s296, 8
      %s301 = sadd.s32 %s299, %s300
      %s302 = smul.addr %s301, 8
      %s303 = scalar_lea.vmem %s0, %s302
      %p304 = scmp.lt.s32.totalorder %s20, 1
      %s305 = scalar_select %p304, %s20, 1
      %s306 = smul.addr %s305, 4
      %s307 = smul.addr %s306, 4
      %s308 = scalar_lea.vmem %s1, %s307
      %p309 = scmp.lt.s32.totalorder %s20, 1
      %s310 = scalar_select %p309, %s20, 1
      %s311 = scalar_lea.vmem %s2, %s310
      %p312 = scmp.lt.s32.totalorder %s20, 1
      %s313 = scalar_select %p312, %s20, 1
      %s314 = smul.addr %s313, 4
      %s315 = smul.addr %s314, 4
      %s316 = scalar_lea.vmem %s3, %s315
      %p317 = scmp.lt.s32.totalorder %s20, 1
      %s318 = scalar_select %p317, %s20, 1
      %s319 = scalar_lea.vmem %s4, %s318
      %p320 = scmp.lt.s32.totalorder %s20, 1
      %s321 = scalar_select %p320, %s20, 1
      %p322 = scmp.lt.s32.totalorder %s21, 0
      %s323 = scalar_select %p322, %s21, 0
      %s324 = smul.addr %s323, 8
      %s325 = smul.addr %s321, 8
      %s326 = sadd.s32 %s324, %s325
      %s327 = smul.addr %s326, 8
      %s328 = scalar_lea.vmem %s5, %s327
      %v330 = vld [vmem:[%s303] sm:$0xff]
      %v331 = vld [vmem:[%s303 + $0x8] sm:$0xff]
      %v332 = vld [vmem:[%s303 + $0x10] sm:$0xff]
      %v333 = vld [vmem:[%s303 + $0x18] sm:$0xff]
      %v334 = vld [vmem:[%s303 + $0x20] sm:$0xff]
      %v335 = vld [vmem:[%s303 + $0x28] sm:$0xff]
      %v336 = vld [vmem:[%s303 + $0x30] sm:$0xff]
      %v337 = vld [vmem:[%s303 + $0x38] sm:$0xff]
      %v338 = vpack.c.bf16 %v331, %v330
      %v339 = vpack.c.bf16 %v333, %v332
      %v340 = vpack.c.bf16 %v335, %v334
      %v341 = vpack.c.bf16 %v337, %v336
      %v342 = vld [vmem:[%s308] sm:$0xf]
      %v343 = vld [vmem:[%s308 + $0x4] sm:$0xf]
      %v344 = vld [vmem:[%s308 + $0x8] sm:$0xf]
      %v345 = vld [vmem:[%s308 + $0xc] sm:$0xf]
      %v346 = vld [vmem:[%s311] sm:$0x1]
      %v348 = vperm.slane %v346, 0
      %v354 = vunpack.c.l.b16 %v342
      %v355 = vunpack.c.l.b16 %v343
      %v356 = vunpack.c.l.b16 %v344
      %v357 = vunpack.c.l.b16 %v345
      %v358 = vpack.c.b16 %v355, %v354
      %v359 = vpack.c.b16 %v357, %v356
      %vm362 = vcmask 261120
      %v364 = vsel %vm362, %v338, 0
      %v367 = vsel %vm362, %v339, 0
      %v370 = vsel %vm362, %v340, 0
      %v373 = vsel %vm362, %v341, 0
      %375 = vmatpush.bf16.msra.mxu0 0
      %376 = vmatpush.bf16.msra.mxu0 0
      %377 = vmatpush.bf16.msra.mxu0 0
      %378 = vmatpush.bf16.msra.mxu0 0
      %379 = vmatpush.bf16.msra.mxu0 0
      %380 = vmatpush.bf16.msra.mxu0 0
      %381 = vmatpush.bf16.msra.mxu0 %v359
      %382 = vmatpush.bf16.msra.mxu0 %v358
      %383 = vmatmul.bf16.gmra.mxu0 %v364
      %v384 = vpop.f32.mrf.mxu0
      %v385 = vadd.f32 %v348, %v384
      %v386 = vpop.f32.mrf.mxu0
      %v387 = vadd.f32 %v348, %v386
      %388 = vmatmul.bf16.gmra.mxu0 %v367
      %v389 = vpop.f32.mrf.mxu0
      %v390 = vadd.f32 %v348, %v389
      %v391 = vpop.f32.mrf.mxu0
      %v392 = vadd.f32 %v348, %v391
      %393 = vmatmul.bf16.gmra.mxu0 %v370
      %v394 = vpop.f32.mrf.mxu0
      %v395 = vadd.f32 %v348, %v394
      %v396 = vpop.f32.mrf.mxu0
      %v397 = vadd.f32 %v348, %v396
      %398 = vmatmul.bf16.gmra.mxu0 %v373
      %v399 = vpop.f32.mrf.mxu0
      %v400 = vadd.f32 %v348, %v399
      %v401 = vpop.f32.mrf.mxu0
      %v402 = vadd.f32 %v348, %v401
      %403 = vdwg.mxu0
      %v404 = vmax.f32 %v385, 0.0
      %v405 = vmax.f32 %v387, 0.0
      %v406 = vmax.f32 %v390, 0.0
      %v407 = vmax.f32 %v392, 0.0
      %v408 = vmax.f32 %v395, 0.0
      %v409 = vmax.f32 %v397, 0.0
      %v410 = vmax.f32 %v400, 0.0
      %v411 = vmax.f32 %v402, 0.0
      %v412 = vpack.c.bf16 %v405, %v404
      %v413 = vpack.c.bf16 %v407, %v406
      %v414 = vpack.c.bf16 %v409, %v408
      %v415 = vpack.c.bf16 %v411, %v410
      %v416 = vld [vmem:[%s316] sm:$0xf]
      %v417 = vld [vmem:[%s316 + $0x4] sm:$0xf]
      %v418 = vld [vmem:[%s316 + $0x8] sm:$0xf]
      %v419 = vld [vmem:[%s316 + $0xc] sm:$0xf]
      %v420 = vld [vmem:[%s319] sm:$0x1]
      %v422 = vperm.slane %v420, 0
      %v428 = vunpack.c.l.b16 %v416
      %v429 = vunpack.c.l.b16 %v417
      %v430 = vunpack.c.l.b16 %v418
      %v431 = vunpack.c.l.b16 %v419
      %v432 = vpack.c.b16 %v429, %v428
      %v433 = vpack.c.b16 %v431, %v430
      %v437 = vsel %vm362, %v412, 0
      %v440 = vsel %vm362, %v413, 0
      %v443 = vsel %vm362, %v414, 0
      %v446 = vsel %vm362, %v415, 0
      %448 = vmatpush.bf16.msra.mxu0 0
      %449 = vmatpush.bf16.msra.mxu0 0
      %450 = vmatpush.bf16.msra.mxu0 0
      %451 = vmatpush.bf16.msra.mxu0 0
      %452 = vmatpush.bf16.msra.mxu0 0
      %453 = vmatpush.bf16.msra.mxu0 0
      %454 = vmatpush.bf16.msra.mxu0 %v433
      %455 = vmatpush.bf16.msra.mxu0 %v432
      %456 = vmatmul.bf16.gmra.mxu0 %v437
      %v457 = vpop.f32.mrf.mxu0
      %v458 = vadd.f32 %v422, %v457
      %v459 = vpop.f32.mrf.mxu0
      %v460 = vadd.f32 %v422, %v459
      %461 = vmatmul.bf16.gmra.mxu0 %v440
      %v462 = vpop.f32.mrf.mxu0
      %v463 = vadd.f32 %v422, %v462
      %v464 = vpop.f32.mrf.mxu0
      %v465 = vadd.f32 %v422, %v464
      %466 = vmatmul.bf16.gmra.mxu0 %v443
      %v467 = vpop.f32.mrf.mxu0
      %v468 = vadd.f32 %v422, %v467
      %v469 = vpop.f32.mrf.mxu0
      %v470 = vadd.f32 %v422, %v469
      %471 = vmatmul.bf16.gmra.mxu0 %v446
      %v472 = vpop.f32.mrf.mxu0
      %v473 = vadd.f32 %v422, %v472
      %v474 = vpop.f32.mrf.mxu0
      %v475 = vadd.f32 %v422, %v474
      %476 = vdwg.mxu0
      %477 = vst.msk [vmem:[%s328] sm:$0xff] %vm362, %v458
      %478 = vst.msk [vmem:[%s328 + $0x8] sm:$0xff] %vm362, %v460
      %479 = vst.msk [vmem:[%s328 + $0x10] sm:$0xff] %vm362, %v463
      %480 = vst.msk [vmem:[%s328 + $0x18] sm:$0xff] %vm362, %v465
      %481 = vst.msk [vmem:[%s328 + $0x20] sm:$0xff] %vm362, %v468
      %482 = vst.msk [vmem:[%s328 + $0x28] sm:$0xff] %vm362, %v470
      %483 = vst.msk [vmem:[%s328 + $0x30] sm:$0xff] %vm362, %v473
      %484 = vst.msk [vmem:[%s328 + $0x38] sm:$0xff] %vm362, %v475
      %p485 = scmp.lt.s32.totalorder %s20, 1
      %s486 = scalar_select %p485, %s20, 1
      %p487 = scmp.lt.s32.totalorder %s21, 0
      %s488 = scalar_select %p487, %s21, 0
      %s489 = smul.addr %s488, 8
      %s490 = smul.addr %s486, 8
      %s491 = sadd.s32 %s489, %s490
      %s492 = smul.addr %s491, 8
      %s493 = scalar_lea.vmem %s5, %s492
      // Predicated region
      $region41: #{tpu_custom_call.1} parent=39 // pred_check
        %p494 = pneg %p180
      $region42: #{tpu_custom_call.1} parent=39 // pred_check_branch
        %496 = sbr.rel (%p494) target = $region44
      $region43: #{tpu_custom_call.1} parent=39 // pred_region
        _
      $region44: #{tpu_custom_call.1} parent=39 // pred_fallthru
        _
    $region40: #{tpu_custom_call.1} parent=5 // pred_fallthru
      _
    %p497 = scmp.le.s32.totalorder 2, %s11
    // Predicated region
    $region45: #{tpu_custom_call.1} parent=5 // pred_check
      %p498 = pneg %p497
    $region46: #{tpu_custom_call.1} parent=5 // pred_check_branch
      %500 = sbr.rel (%p498) target = $region48
    $region47: #{tpu_custom_call.1} parent=5 // pred_region
      %s501 = ssub.s32 %s11, 2
      // Predicated region
      $region49: #{tpu_custom_call.1} parent=47 // pred_check
        %p502 = pneg %p186
      $region50: #{tpu_custom_call.1} parent=47 // pred_check_branch
        %504 = sbr.rel (%p502) target = $region52
      $region51: #{tpu_custom_call.1} parent=47 // pred_region
        %p505 = scmp.lt.s32.totalorder %s22, 1
        %s506 = scalar_select %p505, %s22, 1
        %p507 = scmp.lt.s32.totalorder %s23, 0
        %s508 = scalar_select %p507, %s23, 0
        %s509 = smul.addr %s508, 8
        %s510 = smul.addr %s506, 8
        %s511 = sadd.s32 %s509, %s510
        %s512 = smul.addr %s511, 8
        %s513 = scalar_lea.vmem %s5, %s512
      $region52: #{tpu_custom_call.1} parent=47 // pred_fallthru
        _
    $region48: #{tpu_custom_call.1} parent=5 // pred_fallthru
      _
  $region6: #{tpu_custom_call.1} parent=0 // loop_footer
    %s15 = sadd.s32 1, %s11
  $region7: #{tpu_custom_call.1} parent=0 // loop_footer_branch
    %10 = sbr.rel target = $region3
  $region8: #{tpu_custom_call.1} parent=0 // loop_exit
    _

</llo_original>
